<compile_context>
chip_gen: v7x
topology: tpu7x:2x2x1
jax: 0.10.0
libtpu: 0.0.40
codegen_flags: <defaults>
</compile_context>

<pallas_src>
import functools

import jax
import jax.numpy as jnp
from jax.experimental import pallas as pl
from jax.experimental.pallas import tpu as pltpu

_VMEM_LIMIT = 32 * 1024 * 1024  # explicit scoped-VMEM budget (portable v5e/v6e/v7x)


# ----------------------------------------------------------------------------
# small helpers
# ----------------------------------------------------------------------------
def _round128(n):
    return ((n + 127) // 128) * 128


def _pad_axis(a, axis, size):
    pad = size - a.shape[axis]
    if pad <= 0:
        return a
    widths = [(0, 0)] * a.ndim
    widths[axis] = (0, pad)
    return jnp.pad(a, widths)


def _pick_tile(m, target):
    """Largest divisor of m that is <= target and sublane-friendly."""
    for t in range(min(m, target), 0, -1):
        if m % t == 0 and (t % 8 == 0 or t == m):
            return t
    return m


def _bn_fold(s, q, count, gamma, beta, eps):
    """Fold batch stats + affine into one per-channel (scale, shift) FMA."""
    mu = s / count
    var = jnp.maximum(q / count - mu * mu, 0.0)
    scale = gamma.reshape(1, -1).astype(jnp.float32) * jax.lax.rsqrt(var + eps)
    shift = beta.reshape(1, -1).astype(jnp.float32) - mu * scale
    return scale, shift


# ----------------------------------------------------------------------------
# Kernel A: 1x1-conv-as-matmul (+ optional fused BN+ReLU on the input)
#           + per-channel sum / sum-of-squares accumulation
# ----------------------------------------------------------------------------
def _matmul_stats_kernel(*refs, pre_bn):
    if pre_bn:
        x_ref, w_ref, sc_ref, sh_ref, y_ref, sum_ref, sq_ref = refs
    else:
        x_ref, w_ref, y_ref, sum_ref, sq_ref = refs

    x = x_ref[...]
    if pre_bn:  # previous stage's BN + ReLU fused here (single FMA, f32 VPU math)
        x = jnp.maximum(x.astype(jnp.float32) * sc_ref[...] + sh_ref[...], 0.0)
        x = x.astype(jnp.bfloat16)

    y = jnp.dot(x, w_ref[...], preferred_element_type=jnp.float32)  # bf16 MXU, f32 acc

    @pl.when(pl.program_id(0) == 0)
    def _init():
        sum_ref[...] = jnp.zeros_like(sum_ref)
        sq_ref[...] = jnp.zeros_like(sq_ref)

    sum_ref[...] += jnp.sum(y, axis=0, keepdims=True)
    sq_ref[...] += jnp.sum(y * y, axis=0, keepdims=True)
    y_ref[...] = y.astype(y_ref.dtype)


def _conv1x1_stats(x_flat, w, pre=None, tm_target=512):
    # tm_target: biggest sublane-friendly divisor of M <= 512 (well inside the
    # VMEM budget at these channel widths); derive from vmem_limit for huge C.
    M, K = x_flat.shape
    Cout = w.shape[1]
    tm = _pick_tile(M, tm_target)

    in_specs = [pl.BlockSpec((tm, K), lambda i: (i, 0)),
                pl.BlockSpec((K, Cout), lambda i: (0, 0))]
    args = [x_flat, w]
    if pre is not None:
        scale, shift = pre
        in_specs += [pl.BlockSpec((1, K), lambda i: (0, 0)),
                     pl.BlockSpec((1, K), lambda i: (0, 0))]
        args += [scale, shift]

    return pl.pallas_call(
        functools.partial(_matmul_stats_kernel, pre_bn=pre is not None),
        grid=(M // tm,),
        in_specs=in_specs,
        out_specs=[pl.BlockSpec((tm, Cout), lambda i: (i, 0)),
                   pl.BlockSpec((1, Cout), lambda i: (0, 0)),   # revisited accumulator
                   pl.BlockSpec((1, Cout), lambda i: (0, 0))],
        out_shape=[jax.ShapeDtypeStruct((M, Cout), jnp.bfloat16),
                   jax.ShapeDtypeStruct((1, Cout), jnp.float32),
                   jax.ShapeDtypeStruct((1, Cout), jnp.float32)],
        compiler_params=pltpu.CompilerParams(
            dimension_semantics=("arbitrary",),      # stats accumulate across M tiles
            vmem_limit_bytes=_VMEM_LIMIT),
    )(*args)


# ----------------------------------------------------------------------------
# Kernel A': fused stage-3 + projection-shortcut dual matmul.
#   y3  = (BN2+ReLU applied to y2) @ W3      (+ its per-channel stats)
#   res = x_strided @ Ws                     (+ its per-channel stats)
#   One pallas_call instead of two -> one less launch, two MXU streams per
#   grid step hide each other's input DMA.
# ----------------------------------------------------------------------------
def _dual_matmul_stats_kernel(x_ref, w_ref, sc_ref, sh_ref, xs_ref, ws_ref,
                              y_ref, r_ref, sum_ref, sq_ref, rsum_ref, rsq_ref):
    x = jnp.maximum(x_ref[...].astype(jnp.float32) * sc_ref[...] + sh_ref[...], 0.0)
    x = x.astype(jnp.bfloat16)
    y = jnp.dot(x, w_ref[...], preferred_element_type=jnp.float32)
    r = jnp.dot(xs_ref[...], ws_ref[...], preferred_element_type=jnp.float32)

    @pl.when(pl.program_id(0) == 0)
    def _init():
        sum_ref[...] = jnp.zeros_like(sum_ref)
        sq_ref[...] = jnp.zeros_like(sq_ref)
        rsum_ref[...] = jnp.zeros_like(rsum_ref)
        rsq_ref[...] = jnp.zeros_like(rsq_ref)

    sum_ref[...] += jnp.sum(y, axis=0, keepdims=True)
    sq_ref[...] += jnp.sum(y * y, axis=0, keepdims=True)
    rsum_ref[...] += jnp.sum(r, axis=0, keepdims=True)
    rsq_ref[...] += jnp.sum(r * r, axis=0, keepdims=True)
    y_ref[...] = y.astype(y_ref.dtype)
    r_ref[...] = r.astype(r_ref.dtype)


def _dual_conv1x1_stats(y2_flat, w3, sc2, sh2, xs_flat, ws, tm_target=512):
    M, K = y2_flat.shape
    Ks = xs_flat.shape[1]
    Cout = w3.shape[1]
    tm = _pick_tile(M, tm_target)

    return pl.pallas_call(
        _dual_matmul_stats_kernel,
        grid=(M // tm,),
        in_specs=[pl.BlockSpec((tm, K), lambda i: (i, 0)),
                  pl.BlockSpec((K, Cout), lambda i: (0, 0)),
                  pl.BlockSpec((1, K), lambda i: (0, 0)),
                  pl.BlockSpec((1, K), lambda i: (0, 0)),
                  pl.BlockSpec((tm, Ks), lambda i: (i, 0)),
                  pl.BlockSpec((Ks, Cout), lambda i: (0, 0))],
        out_specs=[pl.BlockSpec((tm, Cout), lambda i: (i, 0)),
                   pl.BlockSpec((tm, Cout), lambda i: (i, 0)),
                   pl.BlockSpec((1, Cout), lambda i: (0, 0)),
                   pl.BlockSpec((1, Cout), lambda i: (0, 0)),
                   pl.BlockSpec((1, Cout), lambda i: (0, 0)),
                   pl.BlockSpec((1, Cout), lambda i: (0, 0))],
        out_shape=[jax.ShapeDtypeStruct((M, Cout), jnp.bfloat16),
                   jax.ShapeDtypeStruct((M, Cout), jnp.bfloat16),
                   jax.ShapeDtypeStruct((1, Cout), jnp.float32),
                   jax.ShapeDtypeStruct((1, Cout), jnp.float32),
                   jax.ShapeDtypeStruct((1, Cout), jnp.float32),
                   jax.ShapeDtypeStruct((1, Cout), jnp.float32)],
        compiler_params=pltpu.CompilerParams(
            dimension_semantics=("arbitrary",),
            vmem_limit_bytes=_VMEM_LIMIT),
    )(y2_flat, w3, sc2, sh2, xs_flat, ws)


# ----------------------------------------------------------------------------
# Kernel B: 3x3 stride-s conv without im2col.
#   - fuses the stage-1 BN+ReLU on its input
#   - zero-padded halo tile lives in VMEM scratch
#   - 9 shifted-window matmuls accumulated in f32
#   - accumulates stage-2 per-channel stats
# ----------------------------------------------------------------------------
def _conv3x3_kernel(y1_ref, sc_ref, sh_ref, w_ref,
                    y2_ref, sum_ref, sq_ref, pad_ref, *, stride):
    n = pl.program_id(0)
    _, H, W, C = y1_ref.shape
    _, Ho, Wo, Cout = y2_ref.shape

    @pl.when(n == 0)
    def _init():
        pad_ref[...] = jnp.zeros_like(pad_ref)   # zero halo border stays valid for all n
        sum_ref[...] = jnp.zeros_like(sum_ref)
        sq_ref[...] = jnp.zeros_like(sq_ref)

    # fused stage-1 BN + ReLU (single FMA, f32), then fill the halo interior.
    xin = y1_ref[0].astype(jnp.float32)
    xin = jnp.maximum(xin * sc_ref[...].reshape(1, 1, C)
                      + sh_ref[...].reshape(1, 1, C), 0.0)
    pad_ref[1:H + 1, 1:W + 1, :] = xin.astype(pad_ref.dtype)

    # 9 shifted-window matmuls (no im2col materialization).
    acc = jnp.zeros((Ho * Wo, Cout), jnp.float32)
    for t in range(9):
        dy, dx = t // 3, t % 3
        if stride == 1:
            win = pad_ref[dy:dy + Ho, dx:dx + Wo, :]
        else:
            win = pad_ref[pl.ds(dy, Ho, stride=stride),
                          pl.ds(dx, Wo, stride=stride), :]
        acc = acc + jnp.dot(win.reshape(Ho * Wo, C), w_ref[t],
                            preferred_element_type=jnp.float32)

    sum_ref[...] += jnp.sum(acc, axis=0, keepdims=True)
    sq_ref[...] += jnp.sum(acc * acc, axis=0, keepdims=True)
    y2_ref[...] = acc.reshape(1, Ho, Wo, Cout).astype(y2_ref.dtype)


def _conv3x3_stats(y1_nhwc, scale1, shift1, w2, stride):
    N, H, W, C = y1_nhwc.shape
    Cout = w2.shape[2]
    Ho = (H - 1) // stride + 1
    Wo = (W - 1) // stride + 1

    return pl.pallas_call(
        functools.partial(_conv3x3_kernel, stride=stride),
        grid=(N,),
        in_specs=[pl.BlockSpec((1, H, W, C), lambda n: (n, 0, 0, 0)),
                  pl.BlockSpec((1, C), lambda n: (0, 0)),
                  pl.BlockSpec((1, C), lambda n: (0, 0)),
                  pl.BlockSpec((9, C, Cout), lambda n: (0, 0, 0))],
        out_specs=[pl.BlockSpec((1, Ho, Wo, Cout), lambda n: (n, 0, 0, 0)),
                   pl.BlockSpec((1, Cout), lambda n: (0, 0)),
                   pl.BlockSpec((1, Cout), lambda n: (0, 0))],
        out_shape=[jax.ShapeDtypeStruct((N, Ho, Wo, Cout), jnp.bfloat16),
                   jax.ShapeDtypeStruct((1, Cout), jnp.float32),
                   jax.ShapeDtypeStruct((1, Cout), jnp.float32)],
        scratch_shapes=[pltpu.VMEM((H + 2, W + 2, C), jnp.bfloat16)],
        compiler_params=pltpu.CompilerParams(
            dimension_semantics=("arbitrary",),
            vmem_limit_bytes=_VMEM_LIMIT),
    )(y1_nhwc, scale1, shift1, w2)


# ----------------------------------------------------------------------------
# Kernel C: final fused BN(stage-3) + BN(shortcut)/identity + residual + ReLU
# ----------------------------------------------------------------------------
def _apply_res_kernel(y_ref, r_ref, sc_ref, sh_ref, rsc_ref, rsh_ref, o_ref):
    y = y_ref[...].astype(jnp.float32)
    r = r_ref[...].astype(jnp.float32)
    out = y * sc_ref[...] + sh_ref[...] + r * rsc_ref[...] + rsh_ref[...]
    o_ref[...] = jnp.maximum(out, 0.0).astype(o_ref.dtype)


def _bn_residual_apply(y, res, scale, shift, rscale, rshift, tm_target=512):
    M, E = y.shape
    tm = _pick_tile(M, tm_target)
    return pl.pallas_call(
        _apply_res_kernel,
        grid=(M // tm,),
        in_specs=[pl.BlockSpec((tm, E), lambda i: (i, 0)),
                  pl.BlockSpec((tm, E), lambda i: (i, 0)),
                  pl.BlockSpec((1, E), lambda i: (0, 0)),
                  pl.BlockSpec((1, E), lambda i: (0, 0)),
                  pl.BlockSpec((1, E), lambda i: (0, 0)),
                  pl.BlockSpec((1, E), lambda i: (0, 0))],
        out_specs=pl.BlockSpec((tm, E), lambda i: (i, 0)),
        out_shape=jax.ShapeDtypeStruct((M, E), jnp.float32),
        compiler_params=pltpu.CompilerParams(
            dimension_semantics=("parallel",),        # independent tiles -> 2 TCs on v7x
            vmem_limit_bytes=_VMEM_LIMIT),
    )(y, res, scale, shift, rscale, rshift)


# ----------------------------------------------------------------------------
# BottleNeck forward (wrapper: layout glue + the pallas_calls above)
# ----------------------------------------------------------------------------
def bottleneck_forward(x_nchw, p, stride, eps=1e-5):
    x = jnp.transpose(x_nchw, (0, 2, 3, 1))                 # NCHW -> NHWC
    N, H, W, Cin = x.shape
    C = p['w1'].shape[1]
    E = p['w3'].shape[1]
    Cin_p, C_p, E_p = _round128(Cin), _round128(C), _round128(E)

    # lane-dense channel padding (zeros are inert: padded gamma/beta are 0)
    xb = _pad_axis(x, 3, Cin_p).astype(jnp.bfloat16)
    w1 = _pad_axis(_pad_axis(p['w1'], 0, Cin_p), 1, C_p).astype(jnp.bfloat16)
    w2 = _pad_axis(_pad_axis(p['w2'].reshape(9, C, C), 1, C_p), 2, C_p).astype(jnp.bfloat16)
    w3 = _pad_axis(_pad_axis(p['w3'], 0, C_p), 1, E_p).astype(jnp.bfloat16)
    g1, b1 = _pad_axis(p['g1'], 0, C_p), _pad_axis(p['b1'], 0, C_p)
    g2, b2 = _pad_axis(p['g2'], 0, C_p), _pad_axis(p['b2'], 0, C_p)
    g3, b3 = _pad_axis(p['g3'], 0, E_p), _pad_axis(p['b3'], 0, E_p)

    M1 = N * H * W

    # stage 1: 1x1 conv -> raw y1 (bf16) + batch stats
    y1, s1, q1 = _conv1x1_stats(xb.reshape(M1, Cin_p), w1)
    sc1, sh1 = _bn_fold(s1, q1, M1, g1, b1, eps)

    # stage 2: 3x3 conv (stride, pad=1), stage-1 BN+ReLU fused on its input
    Ho = (H - 1) // stride + 1
    Wo = (W - 1) // stride + 1
    y2, s2, q2 = _conv3x3_stats(y1.reshape(N, H, W, C_p), sc1, sh1, w2, stride)
    M2 = N * Ho * Wo
    sc2, sh2 = _bn_fold(s2, q2, M2, g2, b2, eps)

    if p['ws'] is not None:
        # stage 3 + projection shortcut fused into one dual-matmul kernel
        ws = _pad_axis(_pad_axis(p['ws'], 0, Cin_p), 1, E_p).astype(jnp.bfloat16)
        gs, bs = _pad_axis(p['gs'], 0, E_p), _pad_axis(p['bs'], 0, E_p)
        xs = xb[:, ::stride, ::stride, :].reshape(M2, Cin_p)
        y3, res, s3, q3, ss_, qs_ = _dual_conv1x1_stats(
            y2.reshape(M2, C_p), w3, sc2, sh2, xs, ws)
        sc3, sh3 = _bn_fold(s3, q3, M2, g3, b3, eps)
        rsc, rsh = _bn_fold(ss_, qs_, M2, gs, bs, eps)       # shortcut BN applied below
    else:
        # stage 3 only; identity shortcut (raw input, unit scale / zero shift)
        assert stride == 1 and Cin_p == E_p
        y3, s3, q3 = _conv1x1_stats(y2.reshape(M2, C_p), w3, pre=(sc2, sh2))
        sc3, sh3 = _bn_fold(s3, q3, M2, g3, b3, eps)
        res = xb.reshape(M2, E_p)
        rsc = jnp.ones((1, E_p), jnp.float32)
        rsh = jnp.zeros((1, E_p), jnp.float32)

    # final fused BN3 + shortcut-BN + residual add + ReLU
    out = _bn_residual_apply(y3, res, sc3, sh3, rsc, rsh)    # (M2, E_p) f32
    out = out.reshape(N, Ho, Wo, E_p)[..., :E]
    return jnp.transpose(out, (0, 3, 1, 2))                  # back to NCHW


# ----------------------------------------------------------------------------
# Deterministic parameter init (shapes from BottleNeck.__init__)
# ----------------------------------------------------------------------------
def init_params(key, in_channels, out_channels, stride):
    C, E = out_channels, out_channels * 4
    ks = jax.random.split(key, 12)

    def w(k, shape, fan_in):
        return jax.random.normal(k, shape, jnp.float32) / jnp.sqrt(fan_in)

    p = {
        'w1': w(ks[0], (in_channels, C), in_channels),          # 1x1 conv (Cin, C)
        'g1': 1.0 + 0.1 * jax.random.normal(ks[1], (C,), jnp.float32),
        'b1': 0.1 * jax.random.normal(ks[2], (C,), jnp.float32),
        'w2': w(ks[3], (3, 3, C, C), 9 * C),                    # 3x3 conv, HWIO
        'g2': 1.0 + 0.1 * jax.random.normal(ks[4], (C,), jnp.float32),
        'b2': 0.1 * jax.random.normal(ks[5], (C,), jnp.float32),
        'w3': w(ks[6], (C, E), C),                              # 1x1 conv (C, E)
        'g3': 1.0 + 0.1 * jax.random.normal(ks[7], (E,), jnp.float32),
        'b3': 0.1 * jax.random.normal(ks[8], (E,), jnp.float32),
        'ws': None, 'gs': None, 'bs': None,
    }
    if stride != 1 or in_channels != E:
        p['ws'] = w(ks[9], (in_channels, E), in_channels)       # shortcut 1x1
        p['gs'] = 1.0 + 0.1 * jax.random.normal(ks[10], (E,), jnp.float32)
        p['bs'] = 0.1 * jax.random.normal(ks[11], (E,), jnp.float32)
    return p


# ----------------------------------------------------------------------------
# Pure-JAX f32 reference (independent: uses lax.conv_general_dilated)
# ----------------------------------------------------------------------------
def _ref_conv(x, w_hwio, stride, padding):
    return jax.lax.conv_general_dilated(
        x, w_hwio, window_strides=(stride, stride), padding=padding,
        dimension_numbers=('NCHW', 'HWIO', 'NCHW'))


def _ref_bn(x, g, b, eps):
    mu = jnp.mean(x, axis=(0, 2, 3), keepdims=True)
    var = jnp.mean(jnp.square(x - mu), axis=(0, 2, 3), keepdims=True)
    return ((x - mu) * jax.lax.rsqrt(var + eps)
            * g[None, :, None, None] + b[None, :, None, None])


def bottleneck_reference(x, p, stride, eps=1e-5):
    y = _ref_conv(x, p['w1'].reshape(1, 1, *p['w1'].shape), 1, 'VALID')
    y = jax.nn.relu(_ref_bn(y, p['g1'], p['b1'], eps))
    y = _ref_conv(y, p['w2'], stride, [(1, 1), (1, 1)])
    y = jax.nn.relu(_ref_bn(y, p['g2'], p['b2'], eps))
    y = _ref_conv(y, p['w3'].reshape(1, 1, *p['w3'].shape), 1, 'VALID')
    y = _ref_bn(y, p['g3'], p['b3'], eps)
    if p['ws'] is not None:
        sc = _ref_conv(x, p['ws'].reshape(1, 1, *p['ws'].shape), stride, 'VALID')
        sc = _ref_bn(sc, p['gs'], p['bs'], eps)
    else:
        sc = x
    return jax.nn.relu(y + sc)


# ----------------------------------------------------------------------------
if __name__ == "__main__":
    key = jax.random.PRNGKey(0)
    kA, kB, kx1, kx2 = jax.random.split(key, 4)

    # bf16 matmuls + bf16 intermediates -> compare to the f32 reference with
    # bf16-level tolerances.
    ATOL, RTOL = 1e-1, 3e-2

    # Config A: projection shortcut (stride=2, in_channels != out_channels*4)
    pA = init_params(kA, in_channels=4, out_channels=4, stride=2)
    x1 = jax.random.normal(kx1, (2, 4, 16, 16), jnp.float32)
    outA = jax.block_until_ready(bottleneck_forward(x1, pA, stride=2))
    refA = bottleneck_reference(x1, pA, 2)
    assert outA.shape == (2, 16, 8, 8), outA.shape
    assert jnp.allclose(outA, refA, atol=ATOL, rtol=RTOL), \
        float(jnp.max(jnp.abs(outA - refA)))

    # Config B: identity shortcut (stride=1, in_channels == out_channels*4)
    pB = init_params(kB, in_channels=16, out_channels=4, stride=1)
    x2 = jax.random.normal(kx2, (2, 16, 16, 16), jnp.float32)
    outB = jax.block_until_ready(bottleneck_forward(x2, pB, stride=1))
    refB = bottleneck_reference(x2, pB, 1)
    assert outB.shape == (2, 16, 16, 16), outB.shape
    assert jnp.allclose(outB, refB, atol=ATOL, rtol=RTOL), \
        float(jnp.max(jnp.abs(outB - refB)))

    print("KERNEL_OK")
</pallas_src>

<mosaic_0001>
module attributes {stable_mosaic.version = 11 : i64} {
  func.func @_matmul_stats_kernel(%arg0: i32, %arg1: memref<512x128xbf16, #tpu.memory_space<vmem>>, %arg2: memref<128x128xbf16, #tpu.memory_space<vmem>>, %arg3: memref<512x128xbf16, #tpu.memory_space<vmem>>, %arg4: memref<1x128xf32, #tpu.memory_space<vmem>>, %arg5: memref<1x128xf32, #tpu.memory_space<vmem>>) attributes {dimension_semantics = [#tpu.dimension_semantics<arbitrary>], iteration_bounds = array<i64: 1>, scalar_prefetch = 0 : i64, scratch_operands = 0 : i64, tpu.core_type = #tpu.core_type<tc>, window_params = [{transform_indices = @transform_0, window_bounds = array<i64: 512, 128>}, {pipeline_mode = #tpu.pipeline_mode<synchronous>, transform_indices = @transform_1, window_bounds = array<i64: 128, 128>}, {transform_indices = @transform_2, window_bounds = array<i64: 512, 128>}, {pipeline_mode = #tpu.pipeline_mode<synchronous>, transform_indices = @transform_3, window_bounds = array<i64: 1, 128>}, {pipeline_mode = #tpu.pipeline_mode<synchronous>, transform_indices = @transform_4, window_bounds = array<i64: 1, 128>}]} {
    %c0 = arith.constant 0 : index
    %c0_0 = arith.constant 0 : index
    %0 = vector.load %arg1[%c0, %c0_0] : memref<512x128xbf16, #tpu.memory_space<vmem>>, vector<512x128xbf16>
    %c0_1 = arith.constant 0 : index
    %c0_2 = arith.constant 0 : index
    %1 = vector.load %arg2[%c0_1, %c0_2] : memref<128x128xbf16, #tpu.memory_space<vmem>>, vector<128x128xbf16>
    %cst = arith.constant dense<0.000000e+00> : vector<512x128xf32>
    %2 = tpu.matmul %0, %1, %cst {dimension_numbers = #tpu.dot_dimension_numbers<[1], [0], [0], [1], [0, 0, 1, 1], [], []>} : vector<512x128xbf16>, vector<128x128xbf16>, vector<512x128xf32> -> vector<512x128xf32>
    %c0_i32 = arith.constant 0 : i32
    %3 = arith.cmpi eq, %arg0, %c0_i32 : i32
    %4 = arith.extui %3 : i1 to i32
    %c0_i32_3 = arith.constant 0 : i32
    %5 = arith.cmpi ne, %4, %c0_i32_3 : i32
    scf.if %5 {
      %cst_16 = arith.constant 0.000000e+00 : f32
      %19 = vector.broadcast %cst_16 : f32 to vector<1x128xf32>
      %c0_17 = arith.constant 0 : index
      %c0_18 = arith.constant 0 : index
      %20 = vector.load %arg4[%c0_17, %c0_18] : memref<1x128xf32, #tpu.memory_space<vmem>>, vector<1x128xf32>
      tpu.vector_store %arg4[%c0_17, %c0_18], %19 {strides = array<i32>} : memref<1x128xf32, #tpu.memory_space<vmem>>, vector<1x128xf32>,
      %cst_19 = arith.constant 0.000000e+00 : f32
      %21 = vector.broadcast %cst_19 : f32 to vector<1x128xf32>
      %c0_20 = arith.constant 0 : index
      %c0_21 = arith.constant 0 : index
      %22 = vector.load %arg5[%c0_20, %c0_21] : memref<1x128xf32, #tpu.memory_space<vmem>>, vector<1x128xf32>
      tpu.vector_store %arg5[%c0_20, %c0_21], %21 {strides = array<i32>} : memref<1x128xf32, #tpu.memory_space<vmem>>, vector<1x128xf32>,
    } else {
    }
    %c0_4 = arith.constant 0 : index
    %c0_5 = arith.constant 0 : index
    %6 = vector.load %arg4[%c0_4, %c0_5] : memref<1x128xf32, #tpu.memory_space<vmem>>, vector<1x128xf32>
    %cst_6 = arith.constant dense<0.000000e+00> : vector<128xf32>
    %7 = vector.multi_reduction <add>, %2, %cst_6 [0] : vector<512x128xf32> to vector<128xf32>
    %8 = vector.shape_cast %7 : vector<128xf32> to vector<1x128xf32>
    %9 = arith.addf %6, %8 : vector<1x128xf32>
    %c0_7 = arith.constant 0 : index
    %c0_8 = arith.constant 0 : index
    %10 = vector.load %arg4[%c0_7, %c0_8] : memref<1x128xf32, #tpu.memory_space<vmem>>, vector<1x128xf32>
    tpu.vector_store %arg4[%c0_7, %c0_8], %9 {strides = array<i32>} : memref<1x128xf32, #tpu.memory_space<vmem>>, vector<1x128xf32>,
    %c0_9 = arith.constant 0 : index
    %c0_10 = arith.constant 0 : index
    %11 = vector.load %arg5[%c0_9, %c0_10] : memref<1x128xf32, #tpu.memory_space<vmem>>, vector<1x128xf32>
    %12 = arith.mulf %2, %2 : vector<512x128xf32>
    %cst_11 = arith.constant dense<0.000000e+00> : vector<128xf32>
    %13 = vector.multi_reduction <add>, %12, %cst_11 [0] : vector<512x128xf32> to vector<128xf32>
    %14 = vector.shape_cast %13 : vector<128xf32> to vector<1x128xf32>
    %15 = arith.addf %11, %14 : vector<1x128xf32>
    %c0_12 = arith.constant 0 : index
    %c0_13 = arith.constant 0 : index
    %16 = vector.load %arg5[%c0_12, %c0_13] : memref<1x128xf32, #tpu.memory_space<vmem>>, vector<1x128xf32>
    tpu.vector_store %arg5[%c0_12, %c0_13], %15 {strides = array<i32>} : memref<1x128xf32, #tpu.memory_space<vmem>>, vector<1x128xf32>,
    %17 = arith.truncf %2 : vector<512x128xf32> to vector<512x128xbf16>
    %c0_14 = arith.constant 0 : index
    %c0_15 = arith.constant 0 : index
    %18 = vector.load %arg3[%c0_14, %c0_15] : memref<512x128xbf16, #tpu.memory_space<vmem>>, vector<512x128xbf16>
    tpu.vector_store %arg3[%c0_14, %c0_15], %17 {strides = array<i32>} : memref<512x128xbf16, #tpu.memory_space<vmem>>, vector<512x128xbf16>,
    return
  }
  func.func @transform_0(%arg0: i32) -> (i32, i32) {
    %c0_i32 = arith.constant 0 : i32
    %c0_i32_0 = arith.constant 0 : i32
    return %arg0, %c0_i32 : i32, i32
  }
  func.func @transform_1(%arg0: i32) -> (i32, i32) {
    %c0_i32 = arith.constant 0 : i32
    %c0_i32_0 = arith.constant 0 : i32
    %c0_i32_1 = arith.constant 0 : i32
    return %c0_i32, %c0_i32_0 : i32, i32
  }
  func.func @transform_2(%arg0: i32) -> (i32, i32) {
    %c0_i32 = arith.constant 0 : i32
    %c0_i32_0 = arith.constant 0 : i32
    return %arg0, %c0_i32 : i32, i32
  }
  func.func @transform_3(%arg0: i32) -> (i32, i32) {
    %c0_i32 = arith.constant 0 : i32
    %c0_i32_0 = arith.constant 0 : i32
    %c0_i32_1 = arith.constant 0 : i32
    return %c0_i32, %c0_i32_0 : i32, i32
  }
  func.func @transform_4(%arg0: i32) -> (i32, i32) {
    %c0_i32 = arith.constant 0 : i32
    %c0_i32_0 = arith.constant 0 : i32
    %c0_i32_1 = arith.constant 0 : i32
    return %c0_i32, %c0_i32_0 : i32, i32
  }
}

</mosaic_0001>

<llo_original>
// kernel: tpu_custom_call.1
$region0: #{tpu_custom_call.1}
  #allocation0 [shape = 'u32[]', space=smem, size = 0x4, offset = 0x4, fixed_abs, tag = 'smem constant byte address 0x4 - core index']
  #allocation1 [shape = 'u32[144,128]{1,0:T(1,128)}', space=vmem, size = 0x12000, scoped, tag = 'internal scratch']
  %s0 = inlined_call_operand.hbm [shape: bf16[512,128], index: 0, kind: input, shape index: {}]
  %s1 = inlined_call_operand.hbm [shape: bf16[128,128], index: 1, kind: input, shape index: {}]
  %s2 = inlined_call_operand.hbm [shape: bf16[512,128], index: 2, kind: output, shape index: {0}]
  %s3 = inlined_call_operand.hbm [shape: f32[1,128], index: 3, kind: output, shape index: {1}]
  %s4 = inlined_call_operand.hbm [shape: f32[1,128], index: 4, kind: output, shape index: {2}]
  %5 = xla_tuple %s2, %s3, %s4
  %s6 = sld [smem:[#allocation0]]
  $region46: #{tpu_custom_call.1} parent=0
    _
  %s8 = ssub.s32 1, %s6
  %s9 = scalar_select 0, %s8, %s6
  $region1: #{tpu_custom_call.1} parent=0
    #allocation2 [shape = 'u8[131072]{0}', space=vmem, size = 0x20000, scoped, tag = 'input window, operand 0, single buffered']
    #allocation3 [shape = 's32[1]{0}', space=sflag, size = 0x4, scoped, tag = 'scoped memory for tpu_custom_call.1']
    #allocation4 [shape = 's32[1]{0}', space=sflag, size = 0x4, scoped, tag = 'scoped memory for tpu_custom_call.1']
    #allocation5 [shape = 'u8[32768]{0}', space=vmem, size = 0x8000, scoped, tag = 'input window, operand 1, single buffered']
    #allocation6 [shape = 's32[1]{0}', space=sflag, size = 0x4, scoped, tag = 'scoped memory for tpu_custom_call.1']
    #allocation7 [shape = 'u8[131072]{0}', space=vmem, size = 0x20000, scoped, tag = 'output window, operand 0, single buffered']
    #allocation8 [shape = 'u8[512]{0}', space=vmem, size = 0x400, scoped, tag = 'output window, operand 1, single buffered']
    #allocation9 [shape = 's32[1]{0}', space=sflag, size = 0x4, scoped, tag = 'scoped memory for tpu_custom_call.1']
    #allocation10 [shape = 'u8[512]{0}', space=vmem, size = 0x400, scoped, tag = 'output window, operand 2, single buffered']
    %10 = vsyncpa [#allocation3], 0
    %11 = vsyncpa [#allocation6], 0
    %12 = vsyncpa [#allocation4], 0
    %13 = vsyncpa [#allocation9], 0
    // Predicated region
    $region2: #{tpu_custom_call.1} parent=1 // pred_check
      _
    $region3: #{tpu_custom_call.1} parent=1 // pred_check_branch
      %15 = sbr.rel (0) target = $region5
    $region4: #{tpu_custom_call.1} parent=1 // pred_region
      %s17 = ssub.s32 4096, 4096
      %18 = vsyncadd [#allocation3], %s17
      %s19 = sshll.u32 [#allocation2], 4
      %s20 = int_to_ptr.vmem [resolvable:$true] %s19
      %25 = dma.hbm_to_vmem [thread:$0]  %s0, 4096, %s20, [#allocation3], 64, 64, 4
    $region5: #{tpu_custom_call.1} parent=1 // pred_fallthru
      _
    // Predicated region
    $region6: #{tpu_custom_call.1} parent=1 // pred_check
      _
    $region7: #{tpu_custom_call.1} parent=1 // pred_check_branch
      %27 = sbr.rel (0) target = $region9
    $region8: #{tpu_custom_call.1} parent=1 // pred_region
      %s29 = ssub.s32 1024, 1024
      %30 = vsyncadd [#allocation6], %s29
      %s31 = sshll.u32 [#allocation5], 4
      %s32 = int_to_ptr.vmem [resolvable:$true] %s31
      %37 = dma.hbm_to_vmem [thread:$0]  %s1, 1024, %s32, [#allocation6], 64, 64, 4
    $region9: #{tpu_custom_call.1} parent=1 // pred_fallthru
      _
    // Predicated region
    $region10: #{tpu_custom_call.1} parent=1 // pred_check
      _
    $region11: #{tpu_custom_call.1} parent=1 // pred_check_branch
      %39 = sbr.rel (0) target = $region13
    $region12: #{tpu_custom_call.1} parent=1 // pred_region
      %40 = dma.done [#allocation3], 4096
    $region13: #{tpu_custom_call.1} parent=1 // pred_fallthru
      _
    // Predicated region
    $region14: #{tpu_custom_call.1} parent=1 // pred_check
      _
    $region15: #{tpu_custom_call.1} parent=1 // pred_check_branch
      %42 = sbr.rel (0) target = $region17
    $region16: #{tpu_custom_call.1} parent=1 // pred_region
      %43 = dma.done [#allocation6], 1024
    $region17: #{tpu_custom_call.1} parent=1 // pred_fallthru
      _
    %v45 = vld [vmem:[#allocation2] sm:$0xf]
    %v46 = vld [vmem:[#allocation2 + $0x4] sm:$0xf]
    %v47 = vld [vmem:[#allocation2 + $0x8] sm:$0xf]
    %v48 = vld [vmem:[#allocation2 + $0xc] sm:$0xf]
    %v49 = vld [vmem:[#allocation2 + $0x10] sm:$0xf]
    %v50 = vld [vmem:[#allocation2 + $0x14] sm:$0xf]
    %v51 = vld [vmem:[#allocation2 + $0x18] sm:$0xf]
    %v52 = vld [vmem:[#allocation2 + $0x1c] sm:$0xf]
    %v53 = vld [vmem:[#allocation2 + $0x20] sm:$0xf]
    %v54 = vld [vmem:[#allocation2 + $0x24] sm:$0xf]
    %v55 = vld [vmem:[#allocation2 + $0x28] sm:$0xf]
    %v56 = vld [vmem:[#allocation2 + $0x2c] sm:$0xf]
    %v57 = vld [vmem:[#allocation2 + $0x30] sm:$0xf]
    %v58 = vld [vmem:[#allocation2 + $0x34] sm:$0xf]
    %v59 = vld [vmem:[#allocation2 + $0x38] sm:$0xf]
    %v60 = vld [vmem:[#allocation2 + $0x3c] sm:$0xf]
    %v61 = vld [vmem:[#allocation2 + $0x40] sm:$0xf]
    %v62 = vld [vmem:[#allocation2 + $0x44] sm:$0xf]
    %v63 = vld [vmem:[#allocation2 + $0x48] sm:$0xf]
    %v64 = vld [vmem:[#allocation2 + $0x4c] sm:$0xf]
    %v65 = vld [vmem:[#allocation2 + $0x50] sm:$0xf]
    %v66 = vld [vmem:[#allocation2 + $0x54] sm:$0xf]
    %v67 = vld [vmem:[#allocation2 + $0x58] sm:$0xf]
    %v68 = vld [vmem:[#allocation2 + $0x5c] sm:$0xf]
    %v69 = vld [vmem:[#allocation2 + $0x60] sm:$0xf]
    %v70 = vld [vmem:[#allocation2 + $0x64] sm:$0xf]
    %v71 = vld [vmem:[#allocation2 + $0x68] sm:$0xf]
    %v72 = vld [vmem:[#allocation2 + $0x6c] sm:$0xf]
    %v73 = vld [vmem:[#allocation2 + $0x70] sm:$0xf]
    %v74 = vld [vmem:[#allocation2 + $0x74] sm:$0xf]
    %v75 = vld [vmem:[#allocation2 + $0x78] sm:$0xf]
    %v76 = vld [vmem:[#allocation2 + $0x7c] sm:$0xf]
    %v77 = vld [vmem:[#allocation2 + $0x80] sm:$0xf]
    %v78 = vld [vmem:[#allocation2 + $0x84] sm:$0xf]
    %v79 = vld [vmem:[#allocation2 + $0x88] sm:$0xf]
    %v80 = vld [vmem:[#allocation2 + $0x8c] sm:$0xf]
    %v81 = vld [vmem:[#allocation2 + $0x90] sm:$0xf]
    %v82 = vld [vmem:[#allocation2 + $0x94] sm:$0xf]
    %v83 = vld [vmem:[#allocation2 + $0x98] sm:$0xf]
    %v84 = vld [vmem:[#allocation2 + $0x9c] sm:$0xf]
    %v85 = vld [vmem:[#allocation2 + $0xa0] sm:$0xf]
    %v86 = vld [vmem:[#allocation2 + $0xa4] sm:$0xf]
    %v87 = vld [vmem:[#allocation2 + $0xa8] sm:$0xf]
    %v88 = vld [vmem:[#allocation2 + $0xac] sm:$0xf]
    %v89 = vld [vmem:[#allocation2 + $0xb0] sm:$0xf]
    %v90 = vld [vmem:[#allocation2 + $0xb4] sm:$0xf]
    %v91 = vld [vmem:[#allocation2 + $0xb8] sm:$0xf]
    %v92 = vld [vmem:[#allocation2 + $0xbc] sm:$0xf]
    %v93 = vld [vmem:[#allocation2 + $0xc0] sm:$0xf]
    %v94 = vld [vmem:[#allocation2 + $0xc4] sm:$0xf]
    %v95 = vld [vmem:[#allocation2 + $0xc8] sm:$0xf]
    %v96 = vld [vmem:[#allocation2 + $0xcc] sm:$0xf]
    %v97 = vld [vmem:[#allocation2 + $0xd0] sm:$0xf]
    %v98 = vld [vmem:[#allocation2 + $0xd4] sm:$0xf]
    %v99 = vld [vmem:[#allocation2 + $0xd8] sm:$0xf]
    %v100 = vld [vmem:[#allocation2 + $0xdc] sm:$0xf]
    %v101 = vld [vmem:[#allocation2 + $0xe0] sm:$0xf]
    %v102 = vld [vmem:[#allocation2 + $0xe4] sm:$0xf]
    %v103 = vld [vmem:[#allocation2 + $0xe8] sm:$0xf]
    %v104 = vld [vmem:[#allocation2 + $0xec] sm:$0xf]
    %v105 = vld [vmem:[#allocation2 + $0xf0] sm:$0xf]
    %v106 = vld [vmem:[#allocation2 + $0xf4] sm:$0xf]
    %v107 = vld [vmem:[#allocation2 + $0xf8] sm:$0xf]
    %v108 = vld [vmem:[#allocation2 + $0xfc] sm:$0xf]
    %v109 = vld [vmem:[#allocation5] sm:$0xf]
    %v110 = vld [vmem:[#allocation5 + $0x4] sm:$0xf]
    %v111 = vld [vmem:[#allocation5 + $0x8] sm:$0xf]
    %v112 = vld [vmem:[#allocation5 + $0xc] sm:$0xf]
    %v113 = vld [vmem:[#allocation5 + $0x10] sm:$0xf]
    %v114 = vld [vmem:[#allocation5 + $0x14] sm:$0xf]
    %v115 = vld [vmem:[#allocation5 + $0x18] sm:$0xf]
    %v116 = vld [vmem:[#allocation5 + $0x1c] sm:$0xf]
    %v117 = vld [vmem:[#allocation5 + $0x20] sm:$0xf]
    %v118 = vld [vmem:[#allocation5 + $0x24] sm:$0xf]
    %v119 = vld [vmem:[#allocation5 + $0x28] sm:$0xf]
    %v120 = vld [vmem:[#allocation5 + $0x2c] sm:$0xf]
    %v121 = vld [vmem:[#allocation5 + $0x30] sm:$0xf]
    %v122 = vld [vmem:[#allocation5 + $0x34] sm:$0xf]
    %v123 = vld [vmem:[#allocation5 + $0x38] sm:$0xf]
    %v124 = vld [vmem:[#allocation5 + $0x3c] sm:$0xf]
    %v189 = vunpack.c.l.b16 %v45
    %v190 = vunpack.c.l.b16 %v46
    %v191 = vunpack.c.l.b16 %v47
    %v192 = vunpack.c.l.b16 %v48
    %v193 = vunpack.c.l.b16 %v49
    %v194 = vunpack.c.l.b16 %v50
    %v195 = vunpack.c.l.b16 %v51
    %v196 = vunpack.c.l.b16 %v52
    %v197 = vunpack.c.l.b16 %v53
    %v198 = vunpack.c.l.b16 %v54
    %v199 = vunpack.c.l.b16 %v55
    %v200 = vunpack.c.l.b16 %v56
    %v201 = vunpack.c.l.b16 %v57
    %v202 = vunpack.c.l.b16 %v58
    %v203 = vunpack.c.l.b16 %v59
    %v204 = vunpack.c.l.b16 %v60
    %v205 = vunpack.c.l.b16 %v61
    %v206 = vunpack.c.l.b16 %v62
    %v207 = vunpack.c.l.b16 %v63
    %v208 = vunpack.c.l.b16 %v64
    %v209 = vunpack.c.l.b16 %v65
    %v210 = vunpack.c.l.b16 %v66
    %v211 = vunpack.c.l.b16 %v67
    %v212 = vunpack.c.l.b16 %v68
    %v213 = vunpack.c.l.b16 %v69
    %v214 = vunpack.c.l.b16 %v70
    %v215 = vunpack.c.l.b16 %v71
    %v216 = vunpack.c.l.b16 %v72
    %v217 = vunpack.c.l.b16 %v73
    %v218 = vunpack.c.l.b16 %v74
    %v219 = vunpack.c.l.b16 %v75
    %v220 = vunpack.c.l.b16 %v76
    %v221 = vunpack.c.l.b16 %v77
    %v222 = vunpack.c.l.b16 %v78
    %v223 = vunpack.c.l.b16 %v79
    %v224 = vunpack.c.l.b16 %v80
    %v225 = vunpack.c.l.b16 %v81
    %v226 = vunpack.c.l.b16 %v82
    %v227 = vunpack.c.l.b16 %v83
    %v228 = vunpack.c.l.b16 %v84
    %v229 = vunpack.c.l.b16 %v85
    %v230 = vunpack.c.l.b16 %v86
    %v231 = vunpack.c.l.b16 %v87
    %v232 = vunpack.c.l.b16 %v88
    %v233 = vunpack.c.l.b16 %v89
    %v234 = vunpack.c.l.b16 %v90
    %v235 = vunpack.c.l.b16 %v91
    %v236 = vunpack.c.l.b16 %v92
    %v237 = vunpack.c.l.b16 %v93
    %v238 = vunpack.c.l.b16 %v94
    %v239 = vunpack.c.l.b16 %v95
    %v240 = vunpack.c.l.b16 %v96
    %v241 = vunpack.c.l.b16 %v97
    %v242 = vunpack.c.l.b16 %v98
    %v243 = vunpack.c.l.b16 %v99
    %v244 = vunpack.c.l.b16 %v100
    %v245 = vunpack.c.l.b16 %v101
    %v246 = vunpack.c.l.b16 %v102
    %v247 = vunpack.c.l.b16 %v103
    %v248 = vunpack.c.l.b16 %v104
    %v249 = vunpack.c.l.b16 %v105
    %v250 = vunpack.c.l.b16 %v106
    %v251 = vunpack.c.l.b16 %v107
    %v252 = vunpack.c.l.b16 %v108
    %v253 = vpack.c.b16 %v190, %v189
    %v254 = vpack.c.b16 %v192, %v191
    %v255 = vpack.c.b16 %v194, %v193
    %v256 = vpack.c.b16 %v196, %v195
    %v257 = vpack.c.b16 %v198, %v197
    %v258 = vpack.c.b16 %v200, %v199
    %v259 = vpack.c.b16 %v202, %v201
    %v260 = vpack.c.b16 %v204, %v203
    %v261 = vpack.c.b16 %v206, %v205
    %v262 = vpack.c.b16 %v208, %v207
    %v263 = vpack.c.b16 %v210, %v209
    %v264 = vpack.c.b16 %v212, %v211
    %v265 = vpack.c.b16 %v214, %v213
    %v266 = vpack.c.b16 %v216, %v215
    %v267 = vpack.c.b16 %v218, %v217
    %v268 = vpack.c.b16 %v220, %v219
    %v269 = vpack.c.b16 %v222, %v221
    %v270 = vpack.c.b16 %v224, %v223
    %v271 = vpack.c.b16 %v226, %v225
    %v272 = vpack.c.b16 %v228, %v227
    %v273 = vpack.c.b16 %v230, %v229
    %v274 = vpack.c.b16 %v232, %v231
    %v275 = vpack.c.b16 %v234, %v233
    %v276 = vpack.c.b16 %v236, %v235
    %v277 = vpack.c.b16 %v238, %v237
    %v278 = vpack.c.b16 %v240, %v239
    %v279 = vpack.c.b16 %v242, %v241
    %v280 = vpack.c.b16 %v244, %v243
    %v281 = vpack.c.b16 %v246, %v245
    %v282 = vpack.c.b16 %v248, %v247
    %v283 = vpack.c.b16 %v250, %v249
    %v284 = vpack.c.b16 %v252, %v251
    %v333 = vunpack.c.l.b16 %v109
    %v334 = vunpack.c.l.b16 %v110
    %v335 = vunpack.c.l.b16 %v111
    %v336 = vunpack.c.l.b16 %v112
    %v337 = vunpack.c.l.b16 %v113
    %v338 = vunpack.c.l.b16 %v114
    %v339 = vunpack.c.l.b16 %v115
    %v340 = vunpack.c.l.b16 %v116
    %v341 = vunpack.c.l.b16 %v117
    %v342 = vunpack.c.l.b16 %v118
    %v343 = vunpack.c.l.b16 %v119
    %v344 = vunpack.c.l.b16 %v120
    %v345 = vunpack.c.l.b16 %v121
    %v346 = vunpack.c.l.b16 %v122
    %v347 = vunpack.c.l.b16 %v123
    %v348 = vunpack.c.l.b16 %v124
    %v349 = vpack.c.b16 %v334, %v333
    %v350 = vpack.c.b16 %v336, %v335
    %v351 = vpack.c.b16 %v338, %v337
    %v352 = vpack.c.b16 %v340, %v339
    %v353 = vpack.c.b16 %v342, %v341
    %v354 = vpack.c.b16 %v344, %v343
    %v355 = vpack.c.b16 %v346, %v345
    %v356 = vpack.c.b16 %v348, %v347
    %365 = vmatprep.subr.bf16.mxu0 0
    %366 = vmatpush1.bf16.msra.mxu0 %v349
    %367 = vmatprep.subr.bf16.mxu0 0
    %368 = vmatpush1.bf16.msra.mxu0 %v350
    %369 = vmatprep.subr.bf16.mxu0 0
    %370 = vmatpush1.bf16.msra.mxu0 %v351
    %371 = vmatprep.subr.bf16.mxu0 0
    %372 = vmatpush1.bf16.msra.mxu0 %v352
    %373 = vmatprep.subr.bf16.mxu0 0
    %374 = vmatpush1.bf16.msra.mxu0 %v353
    %375 = vmatprep.subr.bf16.mxu0 0
    %376 = vmatpush1.bf16.msra.mxu0 %v354
    %377 = vmatprep.subr.bf16.mxu0 0
    %378 = vmatpush1.bf16.msra.mxu0 %v355
    %379 = vmatprep.subr.bf16.mxu0 0
    %380 = vmatpush1.bf16.msra.mxu0 %v356
    %381 = vmatprep.subr.bf16.mxu0 0
    %382 = vmatpush1.bf16.msra.mxu0 0
    %383 = vmatprep.subr.bf16.mxu0 0
    %384 = vmatpush1.bf16.msra.mxu0 0
    %385 = vmatprep.subr.bf16.mxu0 0
    %386 = vmatpush1.bf16.msra.mxu0 0
    %387 = vmatprep.subr.bf16.mxu0 0
    %388 = vmatpush1.bf16.msra.mxu0 0
    %389 = vmatprep.subr.bf16.mxu0 0
    %390 = vmatpush1.bf16.msra.mxu0 0
    %391 = vmatprep.subr.bf16.mxu0 0
    %392 = vmatpush1.bf16.msra.mxu0 0
    %393 = vmatprep.subr.bf16.mxu0 0
    %394 = vmatpush1.bf16.msra.mxu0 0
    %395 = vmatprep.subr.bf16.mxu0 0
    %396 = vmatpush1.bf16.msra.mxu0 0
    %397 = vmatprep.mubr.bf16.mxu0 0
    %398 = vmatmul.mubr.bf16.gmra.mrb[0].mxu0 %v253
    %v399 = vpop.f32.mrb[0].mxu0
    %v400 = vadd.f32 0.0, %v399
    %v401 = vpop.f32.mrb[0].mxu0
    %v402 = vpop.f32.mrb[0].mxu0
    %v403 = vadd.f32 0.0, %v402
    %v404 = vpop.f32.mrb[0].mxu0
    %405 = vmatprep.mubr.bf16.mxu0 0
    %406 = vmatmul.mubr.bf16.gmra.mrb[0].mxu0 %v254
    %v407 = vpop.f32.mrb[0].mxu0
    %v408 = vadd.f32 0.0, %v407
    %v409 = vpop.f32.mrb[0].mxu0
    %v410 = vpop.f32.mrb[0].mxu0
    %v411 = vadd.f32 0.0, %v410
    %v412 = vpop.f32.mrb[0].mxu0
    %413 = vmatprep.mubr.bf16.mxu0 0
    %414 = vmatmul.mubr.bf16.gmra.mrb[0].mxu0 %v255
    %v415 = vpop.f32.mrb[0].mxu0
    %v416 = vadd.f32 0.0, %v415
    %v417 = vpop.f32.mrb[0].mxu0
    %v418 = vpop.f32.mrb[0].mxu0
    %v419 = vadd.f32 0.0, %v418
    %v420 = vpop.f32.mrb[0].mxu0
    %421 = vmatprep.mubr.bf16.mxu0 0
    %422 = vmatmul.mubr.bf16.gmra.mrb[0].mxu0 %v256
    %v423 = vpop.f32.mrb[0].mxu0
    %v424 = vadd.f32 0.0, %v423
    %v425 = vpop.f32.mrb[0].mxu0
    %v426 = vpop.f32.mrb[0].mxu0
    %v427 = vadd.f32 0.0, %v426
    %v428 = vpop.f32.mrb[0].mxu0
    %429 = vmatprep.mubr.bf16.mxu0 0
    %430 = vmatmul.mubr.bf16.gmra.mrb[0].mxu0 %v257
    %v431 = vpop.f32.mrb[0].mxu0
    %v432 = vadd.f32 0.0, %v431
    %v433 = vpop.f32.mrb[0].mxu0
    %v434 = vpop.f32.mrb[0].mxu0
    %v435 = vadd.f32 0.0, %v434
    %v436 = vpop.f32.mrb[0].mxu0
    %437 = vmatprep.mubr.bf16.mxu0 0
    %438 = vmatmul.mubr.bf16.gmra.mrb[0].mxu0 %v258
    %v439 = vpop.f32.mrb[0].mxu0
    %v440 = vadd.f32 0.0, %v439
    %v441 = vpop.f32.mrb[0].mxu0
    %v442 = vpop.f32.mrb[0].mxu0
    %v443 = vadd.f32 0.0, %v442
    %v444 = vpop.f32.mrb[0].mxu0
    %445 = vmatprep.mubr.bf16.mxu0 0
    %446 = vmatmul.mubr.bf16.gmra.mrb[0].mxu0 %v259
    %v447 = vpop.f32.mrb[0].mxu0
    %v448 = vadd.f32 0.0, %v447
    %v449 = vpop.f32.mrb[0].mxu0
    %v450 = vpop.f32.mrb[0].mxu0
    %v451 = vadd.f32 0.0, %v450
    %v452 = vpop.f32.mrb[0].mxu0
    %453 = vmatprep.mubr.bf16.mxu0 0
    %454 = vmatmul.mubr.bf16.gmra.mrb[0].mxu0 %v260
    %v455 = vpop.f32.mrb[0].mxu0
    %v456 = vadd.f32 0.0, %v455
    %v457 = vpop.f32.mrb[0].mxu0
    %v458 = vpop.f32.mrb[0].mxu0
    %v459 = vadd.f32 0.0, %v458
    %v460 = vpop.f32.mrb[0].mxu0
    %461 = vmatprep.mubr.bf16.mxu0 0
    %462 = vmatmul.mubr.bf16.gmra.mrb[0].mxu0 %v261
    %v463 = vpop.f32.mrb[0].mxu0
    %v464 = vadd.f32 0.0, %v463
    %v465 = vpop.f32.mrb[0].mxu0
    %v466 = vpop.f32.mrb[0].mxu0
    %v467 = vadd.f32 0.0, %v466
    %v468 = vpop.f32.mrb[0].mxu0
    %469 = vmatprep.mubr.bf16.mxu0 0
    %470 = vmatmul.mubr.bf16.gmra.mrb[0].mxu0 %v262
    %v471 = vpop.f32.mrb[0].mxu0
    %v472 = vadd.f32 0.0, %v471
    %v473 = vpop.f32.mrb[0].mxu0
    %v474 = vpop.f32.mrb[0].mxu0
    %v475 = vadd.f32 0.0, %v474
    %v476 = vpop.f32.mrb[0].mxu0
    %477 = vmatprep.mubr.bf16.mxu0 0
    %478 = vmatmul.mubr.bf16.gmra.mrb[0].mxu0 %v263
    %v479 = vpop.f32.mrb[0].mxu0
    %v480 = vadd.f32 0.0, %v479
    %v481 = vpop.f32.mrb[0].mxu0
    %v482 = vpop.f32.mrb[0].mxu0
    %v483 = vadd.f32 0.0, %v482
    %v484 = vpop.f32.mrb[0].mxu0
    %485 = vmatprep.mubr.bf16.mxu0 0
    %486 = vmatmul.mubr.bf16.gmra.mrb[0].mxu0 %v264
    %v487 = vpop.f32.mrb[0].mxu0
    %v488 = vadd.f32 0.0, %v487
    %v489 = vpop.f32.mrb[0].mxu0
    %v490 = vpop.f32.mrb[0].mxu0
    %v491 = vadd.f32 0.0, %v490
    %v492 = vpop.f32.mrb[0].mxu0
    %493 = vmatprep.mubr.bf16.mxu0 0
    %494 = vmatmul.mubr.bf16.gmra.mrb[0].mxu0 %v265
    %v495 = vpop.f32.mrb[0].mxu0
    %v496 = vadd.f32 0.0, %v495
    %v497 = vpop.f32.mrb[0].mxu0
    %v498 = vpop.f32.mrb[0].mxu0
    %v499 = vadd.f32 0.0, %v498
    %v500 = vpop.f32.mrb[0].mxu0
    %501 = vmatprep.mubr.bf16.mxu0 0
    %502 = vmatmul.mubr.bf16.gmra.mrb[0].mxu0 %v266
    %v503 = vpop.f32.mrb[0].mxu0
    %v504 = vadd.f32 0.0, %v503
    %v505 = vpop.f32.mrb[0].mxu0
    %v506 = vpop.f32.mrb[0].mxu0
    %v507 = vadd.f32 0.0, %v506
    %v508 = vpop.f32.mrb[0].mxu0
    %509 = vmatprep.mubr.bf16.mxu0 0
    %510 = vmatmul.mubr.bf16.gmra.mrb[0].mxu0 %v267
    %v511 = vpop.f32.mrb[0].mxu0
    %v512 = vadd.f32 0.0, %v511
    %v513 = vpop.f32.mrb[0].mxu0
    %v514 = vpop.f32.mrb[0].mxu0
    %v515 = vadd.f32 0.0, %v514
    %v516 = vpop.f32.mrb[0].mxu0
    %517 = vmatprep.mubr.bf16.mxu0 0
    %518 = vmatmul.mubr.bf16.gmra.mrb[0].mxu0 %v268
    %v519 = vpop.f32.mrb[0].mxu0
    %v520 = vadd.f32 0.0, %v519
    %v521 = vpop.f32.mrb[0].mxu0
    %v522 = vpop.f32.mrb[0].mxu0
    %v523 = vadd.f32 0.0, %v522
    %v524 = vpop.f32.mrb[0].mxu0
    %525 = vmatprep.mubr.bf16.mxu0 0
    %526 = vmatmul.mubr.bf16.gmra.mrb[0].mxu0 %v269
    %v527 = vpop.f32.mrb[0].mxu0
    %v528 = vadd.f32 0.0, %v527
    %v529 = vpop.f32.mrb[0].mxu0
    %v530 = vpop.f32.mrb[0].mxu0
    %v531 = vadd.f32 0.0, %v530
    %v532 = vpop.f32.mrb[0].mxu0
    %533 = vmatprep.mubr.bf16.mxu0 0
    %534 = vmatmul.mubr.bf16.gmra.mrb[0].mxu0 %v270
    %v535 = vpop.f32.mrb[0].mxu0
    %v536 = vadd.f32 0.0, %v535
    %v537 = vpop.f32.mrb[0].mxu0
    %v538 = vpop.f32.mrb[0].mxu0
    %v539 = vadd.f32 0.0, %v538
    %v540 = vpop.f32.mrb[0].mxu0
    %541 = vmatprep.mubr.bf16.mxu0 0
    %542 = vmatmul.mubr.bf16.gmra.mrb[0].mxu0 %v271
    %v543 = vpop.f32.mrb[0].mxu0
    %v544 = vadd.f32 0.0, %v543
    %v545 = vpop.f32.mrb[0].mxu0
    %v546 = vpop.f32.mrb[0].mxu0
    %v547 = vadd.f32 0.0, %v546
    %v548 = vpop.f32.mrb[0].mxu0
    %549 = vmatprep.mubr.bf16.mxu0 0
    %550 = vmatmul.mubr.bf16.gmra.mrb[0].mxu0 %v272
    %v551 = vpop.f32.mrb[0].mxu0
    %v552 = vadd.f32 0.0, %v551
    %v553 = vpop.f32.mrb[0].mxu0
    %v554 = vpop.f32.mrb[0].mxu0
    %v555 = vadd.f32 0.0, %v554
    %v556 = vpop.f32.mrb[0].mxu0
    %557 = vmatprep.mubr.bf16.mxu0 0
    %558 = vmatmul.mubr.bf16.gmra.mrb[0].mxu0 %v273
    %v559 = vpop.f32.mrb[0].mxu0
    %v560 = vadd.f32 0.0, %v559
    %v561 = vpop.f32.mrb[0].mxu0
    %v562 = vpop.f32.mrb[0].mxu0
    %v563 = vadd.f32 0.0, %v562
    %v564 = vpop.f32.mrb[0].mxu0
    %565 = vmatprep.mubr.bf16.mxu0 0
    %566 = vmatmul.mubr.bf16.gmra.mrb[0].mxu0 %v274
    %v567 = vpop.f32.mrb[0].mxu0
    %v568 = vadd.f32 0.0, %v567
    %v569 = vpop.f32.mrb[0].mxu0
    %v570 = vpop.f32.mrb[0].mxu0
    %v571 = vadd.f32 0.0, %v570
    %v572 = vpop.f32.mrb[0].mxu0
    %573 = vmatprep.mubr.bf16.mxu0 0
    %574 = vmatmul.mubr.bf16.gmra.mrb[0].mxu0 %v275
    %v575 = vpop.f32.mrb[0].mxu0
    %v576 = vadd.f32 0.0, %v575
    %v577 = vpop.f32.mrb[0].mxu0
    %v578 = vpop.f32.mrb[0].mxu0
    %v579 = vadd.f32 0.0, %v578
    %v580 = vpop.f32.mrb[0].mxu0
    %581 = vmatprep.mubr.bf16.mxu0 0
    %582 = vmatmul.mubr.bf16.gmra.mrb[0].mxu0 %v276
    %v583 = vpop.f32.mrb[0].mxu0
    %v584 = vadd.f32 0.0, %v583
    %v585 = vpop.f32.mrb[0].mxu0
    %v586 = vpop.f32.mrb[0].mxu0
    %v587 = vadd.f32 0.0, %v586
    %v588 = vpop.f32.mrb[0].mxu0
    %589 = vmatprep.mubr.bf16.mxu0 0
    %590 = vmatmul.mubr.bf16.gmra.mrb[0].mxu0 %v277
    %v591 = vpop.f32.mrb[0].mxu0
    %v592 = vadd.f32 0.0, %v591
    %v593 = vpop.f32.mrb[0].mxu0
    %v594 = vpop.f32.mrb[0].mxu0
    %v595 = vadd.f32 0.0, %v594
    %v596 = vpop.f32.mrb[0].mxu0
    %597 = vmatprep.mubr.bf16.mxu0 0
    %598 = vmatmul.mubr.bf16.gmra.mrb[0].mxu0 %v278
    %v599 = vpop.f32.mrb[0].mxu0
    %v600 = vadd.f32 0.0, %v599
    %v601 = vpop.f32.mrb[0].mxu0
    %v602 = vpop.f32.mrb[0].mxu0
    %v603 = vadd.f32 0.0, %v602
    %v604 = vpop.f32.mrb[0].mxu0
    %605 = vmatprep.mubr.bf16.mxu0 0
    %606 = vmatmul.mubr.bf16.gmra.mrb[0].mxu0 %v279
    %v607 = vpop.f32.mrb[0].mxu0
    %v608 = vadd.f32 0.0, %v607
    %v609 = vpop.f32.mrb[0].mxu0
    %v610 = vpop.f32.mrb[0].mxu0
    %v611 = vadd.f32 0.0, %v610
    %v612 = vpop.f32.mrb[0].mxu0
    %613 = vmatprep.mubr.bf16.mxu0 0
    %614 = vmatmul.mubr.bf16.gmra.mrb[0].mxu0 %v280
    %v615 = vpop.f32.mrb[0].mxu0
    %v616 = vadd.f32 0.0, %v615
    %v617 = vpop.f32.mrb[0].mxu0
    %v618 = vpop.f32.mrb[0].mxu0
    %v619 = vadd.f32 0.0, %v618
    %v620 = vpop.f32.mrb[0].mxu0
    %621 = vmatprep.mubr.bf16.mxu0 0
    %622 = vmatmul.mubr.bf16.gmra.mrb[0].mxu0 %v281
    %v623 = vpop.f32.mrb[0].mxu0
    %v624 = vadd.f32 0.0, %v623
    %v625 = vpop.f32.mrb[0].mxu0
    %v626 = vpop.f32.mrb[0].mxu0
    %v627 = vadd.f32 0.0, %v626
    %v628 = vpop.f32.mrb[0].mxu0
    %629 = vmatprep.mubr.bf16.mxu0 0
    %630 = vmatmul.mubr.bf16.gmra.mrb[0].mxu0 %v282
    %v631 = vpop.f32.mrb[0].mxu0
    %v632 = vadd.f32 0.0, %v631
    %v633 = vpop.f32.mrb[0].mxu0
    %v634 = vpop.f32.mrb[0].mxu0
    %v635 = vadd.f32 0.0, %v634
    %v636 = vpop.f32.mrb[0].mxu0
    %637 = vmatprep.mubr.bf16.mxu0 0
    %638 = vmatmul.mubr.bf16.gmra.mrb[0].mxu0 %v283
    %v639 = vpop.f32.mrb[0].mxu0
    %v640 = vadd.f32 0.0, %v639
    %v641 = vpop.f32.mrb[0].mxu0
    %v642 = vpop.f32.mrb[0].mxu0
    %v643 = vadd.f32 0.0, %v642
    %v644 = vpop.f32.mrb[0].mxu0
    %645 = vmatprep.mubr.bf16.mxu0 0
    %646 = vmatmul.mubr.bf16.gmra.mrb[0].mxu0 %v284
    %v647 = vpop.f32.mrb[0].mxu0
    %v648 = vadd.f32 0.0, %v647
    %v649 = vpop.f32.mrb[0].mxu0
    %v650 = vpop.f32.mrb[0].mxu0
    %v651 = vadd.f32 0.0, %v650
    %v652 = vpop.f32.mrb[0].mxu0
    %653 = vdwg.mxu0
    %p654 = scmp.eq.s32.totalorder 0, 0
    // Predicated region
    $region18: #{tpu_custom_call.1} parent=1 // pred_check
      %p655 = pneg %p654
    $region19: #{tpu_custom_call.1} parent=1 // pred_check_branch
      %657 = sbr.rel (%p655) target = $region21
    $region20: #{tpu_custom_call.1} parent=1 // pred_region
      %658 = vst [vmem:[#allocation8] sm:$0x1] 0.0
      %659 = vst [vmem:[#allocation10] sm:$0x1] 0.0
    $region21: #{tpu_custom_call.1} parent=1 // pred_fallthru
      _
    %v660 = vld [vmem:[#allocation8] sm:$0x1]
    %v661 = vadd.f32 %v400, %v403
    %v662 = vadd.f32 %v661, %v408
    %v663 = vadd.f32 %v662, %v411
    %v664 = vadd.f32 %v663, %v416
    %v665 = vadd.f32 %v664, %v419
    %v666 = vadd.f32 %v665, %v424
    %v667 = vadd.f32 %v666, %v427
    %v668 = vadd.f32 %v667, %v432
    %v669 = vadd.f32 %v668, %v435
    %v670 = vadd.f32 %v669, %v440
    %v671 = vadd.f32 %v670, %v443
    %v672 = vadd.f32 %v671, %v448
    %v673 = vadd.f32 %v672, %v451
    %v674 = vadd.f32 %v673, %v456
    %v675 = vadd.f32 %v674, %v459
    %v676 = vadd.f32 %v675, %v464
    %v677 = vadd.f32 %v676, %v467
    %v678 = vadd.f32 %v677, %v472
    %v679 = vadd.f32 %v678, %v475
    %v680 = vadd.f32 %v679, %v480
    %v681 = vadd.f32 %v680, %v483
    %v682 = vadd.f32 %v681, %v488
    %v683 = vadd.f32 %v682, %v491
    %v684 = vadd.f32 %v683, %v496
    %v685 = vadd.f32 %v684, %v499
    %v686 = vadd.f32 %v685, %v504
    %v687 = vadd.f32 %v686, %v507
    %v688 = vadd.f32 %v687, %v512
    %v689 = vadd.f32 %v688, %v515
    %v690 = vadd.f32 %v689, %v520
    %v691 = vadd.f32 %v690, %v523
    %v692 = vadd.f32 %v691, %v528
    %v693 = vadd.f32 %v692, %v531
    %v694 = vadd.f32 %v693, %v536
    %v695 = vadd.f32 %v694, %v539
    %v696 = vadd.f32 %v695, %v544
    %v697 = vadd.f32 %v696, %v547
    %v698 = vadd.f32 %v697, %v552
    %v699 = vadd.f32 %v698, %v555
    %v700 = vadd.f32 %v699, %v560
    %v701 = vadd.f32 %v700, %v563
    %v702 = vadd.f32 %v701, %v568
    %v703 = vadd.f32 %v702, %v571
    %v704 = vadd.f32 %v703, %v576
    %v705 = vadd.f32 %v704, %v579
    %v706 = vadd.f32 %v705, %v584
    %v707 = vadd.f32 %v706, %v587
    %v708 = vadd.f32 %v707, %v592
    %v709 = vadd.f32 %v708, %v595
    %v710 = vadd.f32 %v709, %v600
    %v711 = vadd.f32 %v710, %v603
    %v712 = vadd.f32 %v711, %v608
    %v713 = vadd.f32 %v712, %v611
    %v714 = vadd.f32 %v713, %v616
    %v715 = vadd.f32 %v714, %v619
    %v716 = vadd.f32 %v715, %v624
    %v717 = vadd.f32 %v716, %v627
    %v718 = vadd.f32 %v717, %v632
    %v719 = vadd.f32 %v718, %v635
    %v720 = vadd.f32 %v719, %v640
    %v721 = vadd.f32 %v720, %v643
    %v722 = vadd.f32 %v721, %v648
    %v723 = vadd.f32 %v722, %v651
    %v724 = vrot.slane %v723, 4
    %v725 = vadd.f32 %v723, %v724
    %v726 = vrot.slane %v725, 2
    %v727 = vadd.f32 %v725, %v726
    %v728 = vrot.slane %v727, 1
    %v729 = vadd.f32 %v727, %v728
    %v730 = vadd.f32 %v660, %v729
    %731 = vst [vmem:[#allocation8] sm:$0x1] %v730
    %v732 = vld [vmem:[#allocation10] sm:$0x1]
    %v733 = vmul.f32 %v400, %v400
    %v734 = vmul.f32 %v403, %v403
    %v735 = vmul.f32 %v408, %v408
    %v736 = vmul.f32 %v411, %v411
    %v737 = vmul.f32 %v416, %v416
    %v738 = vmul.f32 %v419, %v419
    %v739 = vmul.f32 %v424, %v424
    %v740 = vmul.f32 %v427, %v427
    %v741 = vmul.f32 %v432, %v432
    %v742 = vmul.f32 %v435, %v435
    %v743 = vmul.f32 %v440, %v440
    %v744 = vmul.f32 %v443, %v443
    %v745 = vmul.f32 %v448, %v448
    %v746 = vmul.f32 %v451, %v451
    %v747 = vmul.f32 %v456, %v456
    %v748 = vmul.f32 %v459, %v459
    %v749 = vmul.f32 %v464, %v464
    %v750 = vmul.f32 %v467, %v467
    %v751 = vmul.f32 %v472, %v472
    %v752 = vmul.f32 %v475, %v475
    %v753 = vmul.f32 %v480, %v480
    %v754 = vmul.f32 %v483, %v483
    %v755 = vmul.f32 %v488, %v488
    %v756 = vmul.f32 %v491, %v491
    %v757 = vmul.f32 %v496, %v496
    %v758 = vmul.f32 %v499, %v499
    %v759 = vmul.f32 %v504, %v504
    %v760 = vmul.f32 %v507, %v507
    %v761 = vmul.f32 %v512, %v512
    %v762 = vmul.f32 %v515, %v515
    %v763 = vmul.f32 %v520, %v520
    %v764 = vmul.f32 %v523, %v523
    %v765 = vmul.f32 %v528, %v528
    %v766 = vmul.f32 %v531, %v531
    %v767 = vmul.f32 %v536, %v536
    %v768 = vmul.f32 %v539, %v539
    %v769 = vmul.f32 %v544, %v544
    %v770 = vmul.f32 %v547, %v547
    %v771 = vmul.f32 %v552, %v552
    %v772 = vmul.f32 %v555, %v555
    %v773 = vmul.f32 %v560, %v560
    %v774 = vmul.f32 %v563, %v563
    %v775 = vmul.f32 %v568, %v568
    %v776 = vmul.f32 %v571, %v571
    %v777 = vmul.f32 %v576, %v576
    %v778 = vmul.f32 %v579, %v579
    %v779 = vmul.f32 %v584, %v584
    %v780 = vmul.f32 %v587, %v587
    %v781 = vmul.f32 %v592, %v592
    %v782 = vmul.f32 %v595, %v595
    %v783 = vmul.f32 %v600, %v600
    %v784 = vmul.f32 %v603, %v603
    %v785 = vmul.f32 %v608, %v608
    %v786 = vmul.f32 %v611, %v611
    %v787 = vmul.f32 %v616, %v616
    %v788 = vmul.f32 %v619, %v619
    %v789 = vmul.f32 %v624, %v624
    %v790 = vmul.f32 %v627, %v627
    %v791 = vmul.f32 %v632, %v632
    %v792 = vmul.f32 %v635, %v635
    %v793 = vmul.f32 %v640, %v640
    %v794 = vmul.f32 %v643, %v643
    %v795 = vmul.f32 %v648, %v648
    %v796 = vmul.f32 %v651, %v651
    %v797 = vadd.f32 %v733, %v734
    %v798 = vadd.f32 %v797, %v735
    %v799 = vadd.f32 %v798, %v736
    %v800 = vadd.f32 %v799, %v737
    %v801 = vadd.f32 %v800, %v738
    %v802 = vadd.f32 %v801, %v739
    %v803 = vadd.f32 %v802, %v740
    %v804 = vadd.f32 %v803, %v741
    %v805 = vadd.f32 %v804, %v742
    %v806 = vadd.f32 %v805, %v743
    %v807 = vadd.f32 %v806, %v744
    %v808 = vadd.f32 %v807, %v745
    %v809 = vadd.f32 %v808, %v746
    %v810 = vadd.f32 %v809, %v747
    %v811 = vadd.f32 %v810, %v748
    %v812 = vadd.f32 %v811, %v749
    %v813 = vadd.f32 %v812, %v750
    %v814 = vadd.f32 %v813, %v751
    %v815 = vadd.f32 %v814, %v752
    %v816 = vadd.f32 %v815, %v753
    %v817 = vadd.f32 %v816, %v754
    %v818 = vadd.f32 %v817, %v755
    %v819 = vadd.f32 %v818, %v756
    %v820 = vadd.f32 %v819, %v757
    %v821 = vadd.f32 %v820, %v758
    %v822 = vadd.f32 %v821, %v759
    %v823 = vadd.f32 %v822, %v760
    %v824 = vadd.f32 %v823, %v761
    %v825 = vadd.f32 %v824, %v762
    %v826 = vadd.f32 %v825, %v763
    %v827 = vadd.f32 %v826, %v764
    %v828 = vadd.f32 %v827, %v765
    %v829 = vadd.f32 %v828, %v766
    %v830 = vadd.f32 %v829, %v767
    %v831 = vadd.f32 %v830, %v768
    %v832 = vadd.f32 %v831, %v769
    %v833 = vadd.f32 %v832, %v770
    %v834 = vadd.f32 %v833, %v771
    %v835 = vadd.f32 %v834, %v772
    %v836 = vadd.f32 %v835, %v773
    %v837 = vadd.f32 %v836, %v774
    %v838 = vadd.f32 %v837, %v775
    %v839 = vadd.f32 %v838, %v776
    %v840 = vadd.f32 %v839, %v777
    %v841 = vadd.f32 %v840, %v778
    %v842 = vadd.f32 %v841, %v779
    %v843 = vadd.f32 %v842, %v780
    %v844 = vadd.f32 %v843, %v781
    %v845 = vadd.f32 %v844, %v782
    %v846 = vadd.f32 %v845, %v783
    %v847 = vadd.f32 %v846, %v784
    %v848 = vadd.f32 %v847, %v785
    %v849 = vadd.f32 %v848, %v786
    %v850 = vadd.f32 %v849, %v787
    %v851 = vadd.f32 %v850, %v788
    %v852 = vadd.f32 %v851, %v789
    %v853 = vadd.f32 %v852, %v790
    %v854 = vadd.f32 %v853, %v791
    %v855 = vadd.f32 %v854, %v792
    %v856 = vadd.f32 %v855, %v793
    %v857 = vadd.f32 %v856, %v794
    %v858 = vadd.f32 %v857, %v795
    %v859 = vadd.f32 %v858, %v796
    %v860 = vrot.slane %v859, 4
    %v861 = vadd.f32 %v859, %v860
    %v862 = vrot.slane %v861, 2
    %v863 = vadd.f32 %v861, %v862
    %v864 = vrot.slane %v863, 1
    %v865 = vadd.f32 %v863, %v864
    %v866 = vadd.f32 %v732, %v865
    %867 = vst [vmem:[#allocation10] sm:$0x1] %v866
    %v868 = vpack.c.bf16 %v403, %v400
    %v869 = vpack.c.bf16 %v411, %v408
    %v870 = vpack.c.bf16 %v419, %v416
    %v871 = vpack.c.bf16 %v427, %v424
    %v872 = vpack.c.bf16 %v435, %v432
    %v873 = vpack.c.bf16 %v443, %v440
    %v874 = vpack.c.bf16 %v451, %v448
    %v875 = vpack.c.bf16 %v459, %v456
    %v876 = vpack.c.bf16 %v467, %v464
    %v877 = vpack.c.bf16 %v475, %v472
    %v878 = vpack.c.bf16 %v483, %v480
    %v879 = vpack.c.bf16 %v491, %v488
    %v880 = vpack.c.bf16 %v499, %v496
    %v881 = vpack.c.bf16 %v507, %v504
    %v882 = vpack.c.bf16 %v515, %v512
    %v883 = vpack.c.bf16 %v523, %v520
    %v884 = vpack.c.bf16 %v531, %v528
    %v885 = vpack.c.bf16 %v539, %v536
    %v886 = vpack.c.bf16 %v547, %v544
    %v887 = vpack.c.bf16 %v555, %v552
    %v888 = vpack.c.bf16 %v563, %v560
    %v889 = vpack.c.bf16 %v571, %v568
    %v890 = vpack.c.bf16 %v579, %v576
    %v891 = vpack.c.bf16 %v587, %v584
    %v892 = vpack.c.bf16 %v595, %v592
    %v893 = vpack.c.bf16 %v603, %v600
    %v894 = vpack.c.bf16 %v611, %v608
    %v895 = vpack.c.bf16 %v619, %v616
    %v896 = vpack.c.bf16 %v627, %v624
    %v897 = vpack.c.bf16 %v635, %v632
    %v898 = vpack.c.bf16 %v643, %v640
    %v899 = vpack.c.bf16 %v651, %v648
    %v932 = vunpack.c.l.b16 %v868
    %v933 = vunpack.c.h.b16 %v868
    %v934 = vunpack.c.l.b16 %v869
    %v935 = vunpack.c.h.b16 %v869
    %v936 = vunpack.c.l.b16 %v870
    %v937 = vunpack.c.h.b16 %v870
    %v938 = vunpack.c.l.b16 %v871
    %v939 = vunpack.c.h.b16 %v871
    %v940 = vunpack.c.l.b16 %v872
    %v941 = vunpack.c.h.b16 %v872
    %v942 = vunpack.c.l.b16 %v873
    %v943 = vunpack.c.h.b16 %v873
    %v944 = vunpack.c.l.b16 %v874
    %v945 = vunpack.c.h.b16 %v874
    %v946 = vunpack.c.l.b16 %v875
    %v947 = vunpack.c.h.b16 %v875
    %v948 = vunpack.c.l.b16 %v876
    %v949 = vunpack.c.h.b16 %v876
    %v950 = vunpack.c.l.b16 %v877
    %v951 = vunpack.c.h.b16 %v877
    %v952 = vunpack.c.l.b16 %v878
    %v953 = vunpack.c.h.b16 %v878
    %v954 = vunpack.c.l.b16 %v879
    %v955 = vunpack.c.h.b16 %v879
    %v956 = vunpack.c.l.b16 %v880
    %v957 = vunpack.c.h.b16 %v880
    %v958 = vunpack.c.l.b16 %v881
    %v959 = vunpack.c.h.b16 %v881
    %v960 = vunpack.c.l.b16 %v882
    %v961 = vunpack.c.h.b16 %v882
    %v962 = vunpack.c.l.b16 %v883
    %v963 = vunpack.c.h.b16 %v883
    %v964 = vunpack.c.l.b16 %v884
    %v965 = vunpack.c.h.b16 %v884
    %v966 = vunpack.c.l.b16 %v885
    %v967 = vunpack.c.h.b16 %v885
    %v968 = vunpack.c.l.b16 %v886
    %v969 = vunpack.c.h.b16 %v886
    %v970 = vunpack.c.l.b16 %v887
    %v971 = vunpack.c.h.b16 %v887
    %v972 = vunpack.c.l.b16 %v888
    %v973 = vunpack.c.h.b16 %v888
    %v974 = vunpack.c.l.b16 %v889
    %v975 = vunpack.c.h.b16 %v889
    %v976 = vunpack.c.l.b16 %v890
    %v977 = vunpack.c.h.b16 %v890
    %v978 = vunpack.c.l.b16 %v891
    %v979 = vunpack.c.h.b16 %v891
    %v980 = vunpack.c.l.b16 %v892
    %v981 = vunpack.c.h.b16 %v892
    %v982 = vunpack.c.l.b16 %v893
    %v983 = vunpack.c.h.b16 %v893
    %v984 = vunpack.c.l.b16 %v894
    %v985 = vunpack.c.h.b16 %v894
    %v986 = vunpack.c.l.b16 %v895
    %v987 = vunpack.c.h.b16 %v895
    %v988 = vunpack.c.l.b16 %v896
    %v989 = vunpack.c.h.b16 %v896
    %v990 = vunpack.c.l.b16 %v897
    %v991 = vunpack.c.h.b16 %v897
    %v992 = vunpack.c.l.b16 %v898
    %v993 = vunpack.c.h.b16 %v898
    %v994 = vunpack.c.l.b16 %v899
    %v995 = vunpack.c.h.b16 %v899
    %v996 = vpack.c.b16 %v932, %v932
    %v997 = vpack.c.b16 %v933, %v933
    %v998 = vpack.c.b16 %v934, %v934
    %v999 = vpack.c.b16 %v935, %v935
    %v1000 = vpack.c.b16 %v936, %v936
    %v1001 = vpack.c.b16 %v937, %v937
    %v1002 = vpack.c.b16 %v938, %v938
    %v1003 = vpack.c.b16 %v939, %v939
    %v1004 = vpack.c.b16 %v940, %v940
    %v1005 = vpack.c.b16 %v941, %v941
    %v1006 = vpack.c.b16 %v942, %v942
    %v1007 = vpack.c.b16 %v943, %v943
    %v1008 = vpack.c.b16 %v944, %v944
    %v1009 = vpack.c.b16 %v945, %v945
    %v1010 = vpack.c.b16 %v946, %v946
    %v1011 = vpack.c.b16 %v947, %v947
    %v1012 = vpack.c.b16 %v948, %v948
    %v1013 = vpack.c.b16 %v949, %v949
    %v1014 = vpack.c.b16 %v950, %v950
    %v1015 = vpack.c.b16 %v951, %v951
    %v1016 = vpack.c.b16 %v952, %v952
    %v1017 = vpack.c.b16 %v953, %v953
    %v1018 = vpack.c.b16 %v954, %v954
    %v1019 = vpack.c.b16 %v955, %v955
    %v1020 = vpack.c.b16 %v956, %v956
    %v1021 = vpack.c.b16 %v957, %v957
    %v1022 = vpack.c.b16 %v958, %v958
    %v1023 = vpack.c.b16 %v959, %v959
    %v1024 = vpack.c.b16 %v960, %v960
    %v1025 = vpack.c.b16 %v961, %v961
    %v1026 = vpack.c.b16 %v962, %v962
    %v1027 = vpack.c.b16 %v963, %v963
    %v1028 = vpack.c.b16 %v964, %v964
    %v1029 = vpack.c.b16 %v965, %v965
    %v1030 = vpack.c.b16 %v966, %v966
    %v1031 = vpack.c.b16 %v967, %v967
    %v1032 = vpack.c.b16 %v968, %v968
    %v1033 = vpack.c.b16 %v969, %v969
    %v1034 = vpack.c.b16 %v970, %v970
    %v1035 = vpack.c.b16 %v971, %v971
    %v1036 = vpack.c.b16 %v972, %v972
    %v1037 = vpack.c.b16 %v973, %v973
    %v1038 = vpack.c.b16 %v974, %v974
    %v1039 = vpack.c.b16 %v975, %v975
    %v1040 = vpack.c.b16 %v976, %v976
    %v1041 = vpack.c.b16 %v977, %v977
    %v1042 = vpack.c.b16 %v978, %v978
    %v1043 = vpack.c.b16 %v979, %v979
    %v1044 = vpack.c.b16 %v980, %v980
    %v1045 = vpack.c.b16 %v981, %v981
    %v1046 = vpack.c.b16 %v982, %v982
    %v1047 = vpack.c.b16 %v983, %v983
    %v1048 = vpack.c.b16 %v984, %v984
    %v1049 = vpack.c.b16 %v985, %v985
    %v1050 = vpack.c.b16 %v986, %v986
    %v1051 = vpack.c.b16 %v987, %v987
    %v1052 = vpack.c.b16 %v988, %v988
    %v1053 = vpack.c.b16 %v989, %v989
    %v1054 = vpack.c.b16 %v990, %v990
    %v1055 = vpack.c.b16 %v991, %v991
    %v1056 = vpack.c.b16 %v992, %v992
    %v1057 = vpack.c.b16 %v993, %v993
    %v1058 = vpack.c.b16 %v994, %v994
    %v1059 = vpack.c.b16 %v995, %v995
    %1124 = vst [vmem:[#allocation7] sm:$0xf] %v996
    %1125 = vst [vmem:[#allocation7 + $0x4] sm:$0xf] %v997
    %1126 = vst [vmem:[#allocation7 + $0x8] sm:$0xf] %v998
    %1127 = vst [vmem:[#allocation7 + $0xc] sm:$0xf] %v999
    %1128 = vst [vmem:[#allocation7 + $0x10] sm:$0xf] %v1000
    %1129 = vst [vmem:[#allocation7 + $0x14] sm:$0xf] %v1001
    %1130 = vst [vmem:[#allocation7 + $0x18] sm:$0xf] %v1002
    %1131 = vst [vmem:[#allocation7 + $0x1c] sm:$0xf] %v1003
    %1132 = vst [vmem:[#allocation7 + $0x20] sm:$0xf] %v1004
    %1133 = vst [vmem:[#allocation7 + $0x24] sm:$0xf] %v1005
    %1134 = vst [vmem:[#allocation7 + $0x28] sm:$0xf] %v1006
    %1135 = vst [vmem:[#allocation7 + $0x2c] sm:$0xf] %v1007
    %1136 = vst [vmem:[#allocation7 + $0x30] sm:$0xf] %v1008
    %1137 = vst [vmem:[#allocation7 + $0x34] sm:$0xf] %v1009
    %1138 = vst [vmem:[#allocation7 + $0x38] sm:$0xf] %v1010
    %1139 = vst [vmem:[#allocation7 + $0x3c] sm:$0xf] %v1011
    %1140 = vst [vmem:[#allocation7 + $0x40] sm:$0xf] %v1012
    %1141 = vst [vmem:[#allocation7 + $0x44] sm:$0xf] %v1013
    %1142 = vst [vmem:[#allocation7 + $0x48] sm:$0xf] %v1014
    %1143 = vst [vmem:[#allocation7 + $0x4c] sm:$0xf] %v1015
    %1144 = vst [vmem:[#allocation7 + $0x50] sm:$0xf] %v1016
    %1145 = vst [vmem:[#allocation7 + $0x54] sm:$0xf] %v1017
    %1146 = vst [vmem:[#allocation7 + $0x58] sm:$0xf] %v1018
    %1147 = vst [vmem:[#allocation7 + $0x5c] sm:$0xf] %v1019
    %1148 = vst [vmem:[#allocation7 + $0x60] sm:$0xf] %v1020
    %1149 = vst [vmem:[#allocation7 + $0x64] sm:$0xf] %v1021
    %1150 = vst [vmem:[#allocation7 + $0x68] sm:$0xf] %v1022
    %1151 = vst [vmem:[#allocation7 + $0x6c] sm:$0xf] %v1023
    %1152 = vst [vmem:[#allocation7 + $0x70] sm:$0xf] %v1024
    %1153 = vst [vmem:[#allocation7 + $0x74] sm:$0xf] %v1025
    %1154 = vst [vmem:[#allocation7 + $0x78] sm:$0xf] %v1026
    %1155 = vst [vmem:[#allocation7 + $0x7c] sm:$0xf] %v1027
    %1156 = vst [vmem:[#allocation7 + $0x80] sm:$0xf] %v1028
    %1157 = vst [vmem:[#allocation7 + $0x84] sm:$0xf] %v1029
    %1158 = vst [vmem:[#allocation7 + $0x88] sm:$0xf] %v1030
    %1159 = vst [vmem:[#allocation7 + $0x8c] sm:$0xf] %v1031
    %1160 = vst [vmem:[#allocation7 + $0x90] sm:$0xf] %v1032
    %1161 = vst [vmem:[#allocation7 + $0x94] sm:$0xf] %v1033
    %1162 = vst [vmem:[#allocation7 + $0x98] sm:$0xf] %v1034
    %1163 = vst [vmem:[#allocation7 + $0x9c] sm:$0xf] %v1035
    %1164 = vst [vmem:[#allocation7 + $0xa0] sm:$0xf] %v1036
    %1165 = vst [vmem:[#allocation7 + $0xa4] sm:$0xf] %v1037
    %1166 = vst [vmem:[#allocation7 + $0xa8] sm:$0xf] %v1038
    %1167 = vst [vmem:[#allocation7 + $0xac] sm:$0xf] %v1039
    %1168 = vst [vmem:[#allocation7 + $0xb0] sm:$0xf] %v1040
    %1169 = vst [vmem:[#allocation7 + $0xb4] sm:$0xf] %v1041
    %1170 = vst [vmem:[#allocation7 + $0xb8] sm:$0xf] %v1042
    %1171 = vst [vmem:[#allocation7 + $0xbc] sm:$0xf] %v1043
    %1172 = vst [vmem:[#allocation7 + $0xc0] sm:$0xf] %v1044
    %1173 = vst [vmem:[#allocation7 + $0xc4] sm:$0xf] %v1045
    %1174 = vst [vmem:[#allocation7 + $0xc8] sm:$0xf] %v1046
    %1175 = vst [vmem:[#allocation7 + $0xcc] sm:$0xf] %v1047
    %1176 = vst [vmem:[#allocation7 + $0xd0] sm:$0xf] %v1048
    %1177 = vst [vmem:[#allocation7 + $0xd4] sm:$0xf] %v1049
    %1178 = vst [vmem:[#allocation7 + $0xd8] sm:$0xf] %v1050
    %1179 = vst [vmem:[#allocation7 + $0xdc] sm:$0xf] %v1051
    %1180 = vst [vmem:[#allocation7 + $0xe0] sm:$0xf] %v1052
    %1181 = vst [vmem:[#allocation7 + $0xe4] sm:$0xf] %v1053
    %1182 = vst [vmem:[#allocation7 + $0xe8] sm:$0xf] %v1054
    %1183 = vst [vmem:[#allocation7 + $0xec] sm:$0xf] %v1055
    %1184 = vst [vmem:[#allocation7 + $0xf0] sm:$0xf] %v1056
    %1185 = vst [vmem:[#allocation7 + $0xf4] sm:$0xf] %v1057
    %1186 = vst [vmem:[#allocation7 + $0xf8] sm:$0xf] %v1058
    %1187 = vst [vmem:[#allocation7 + $0xfc] sm:$0xf] %v1059
    // Predicated region
    $region22: #{tpu_custom_call.1} parent=1 // pred_check
      _
    $region23: #{tpu_custom_call.1} parent=1 // pred_check_branch
      %1189 = sbr.rel (0) target = $region25
    $region24: #{tpu_custom_call.1} parent=1 // pred_region
      %s1191 = ssub.s32 4096, 4096
      %1192 = vsyncadd [#allocation4], %s1191
      %s1193 = sshll.u32 [#allocation7], 4
      %s1194 = int_to_ptr.vmem [resolvable:$true] %s1193
      %1199 = dma.vmem_to_hbm [thread:$0]  %s1194, 4096, %s2, [#allocation4], 64, 64, 4
    $region25: #{tpu_custom_call.1} parent=1 // pred_fallthru
      _
    // Predicated region
    $region26: #{tpu_custom_call.1} parent=1 // pred_check
      _
    $region27: #{tpu_custom_call.1} parent=1 // pred_check_branch
      %1201 = sbr.rel (0) target = $region29
    $region28: #{tpu_custom_call.1} parent=1 // pred_region
      %s1203 = ssub.s32 16, 16
      %1204 = vsyncadd [#allocation9], %s1203
      %s1206 = sshll.u32 [#allocation8], 4
      %s1207 = int_to_ptr.vmem [resolvable:$true] %s1206
      %1209 = dma.vmem_to_hbm [thread:$0]  %s1207, 16, %s3, [#allocation9]
    $region29: #{tpu_custom_call.1} parent=1 // pred_fallthru
      _
    // Predicated region
    $region30: #{tpu_custom_call.1} parent=1 // pred_check
      _
    $region31: #{tpu_custom_call.1} parent=1 // pred_check_branch
      %1211 = sbr.rel (0) target = $region33
    $region32: #{tpu_custom_call.1} parent=1 // pred_region
      %s1213 = ssub.s32 16, 16
      %1214 = vsyncadd [#allocation9], %s1213
      %s1216 = sshll.u32 [#allocation10], 4
      %s1217 = int_to_ptr.vmem [resolvable:$true] %s1216
      %1219 = dma.vmem_to_hbm [thread:$0]  %s1217, 16, %s4, [#allocation9]
    $region33: #{tpu_custom_call.1} parent=1 // pred_fallthru
      _
    // Predicated region
    $region34: #{tpu_custom_call.1} parent=1 // pred_check
      _
    $region35: #{tpu_custom_call.1} parent=1 // pred_check_branch
      %1221 = sbr.rel (0) target = $region37
    $region36: #{tpu_custom_call.1} parent=1 // pred_region
      %1222 = dma.done [#allocation4], 4096
    $region37: #{tpu_custom_call.1} parent=1 // pred_fallthru
      _
    // Predicated region
    $region38: #{tpu_custom_call.1} parent=1 // pred_check
      _
    $region39: #{tpu_custom_call.1} parent=1 // pred_check_branch
      %1224 = sbr.rel (0) target = $region41
    $region40: #{tpu_custom_call.1} parent=1 // pred_region
      %1225 = dma.done [#allocation9], 16
    $region41: #{tpu_custom_call.1} parent=1 // pred_fallthru
      _
    // Predicated region
    $region42: #{tpu_custom_call.1} parent=1 // pred_check
      _
    $region43: #{tpu_custom_call.1} parent=1 // pred_check_branch
      %1227 = sbr.rel (0) target = $region45
    $region44: #{tpu_custom_call.1} parent=1 // pred_region
      %1228 = dma.done [#allocation9], 16
    $region45: #{tpu_custom_call.1} parent=1 // pred_fallthru
      _
    %1229 = vsyncpa [#allocation3], 1
    %1230 = vsyncpa [#allocation6], 1
    %1231 = vsyncpa [#allocation4], 1
    %1232 = vsyncpa [#allocation9], 1

</llo_original>
